<compile_context>
chip_gen: v7x
topology: tpu7x:2x2x1
jax: 0.10.0
libtpu: 0.0.40
codegen_flags: <defaults>
</compile_context>

<pallas_src>
import functools

import numpy as np
import jax
import jax.numpy as jnp
from jax import lax
from jax.experimental import pallas as pl
from jax.experimental.pallas import tpu as pltpu


# ----------------------------------------------------------------------------
# Pallas kernel: fused DoubleConv (conv3x3 -> BN(folded) -> ReLU, twice)
# ----------------------------------------------------------------------------
def _up_double_conv_kernel(x_ref, m0_ref, m2_ref, w1_ref, b1_ref,
                           w2_ref, b2_ref, o_ref, *, H, W, g0, Lg, Lxr):
    """One image per grid step.

    Layout: pixels row-major on lanes (stride W, no spatial padding).  A
    guard-banded buffer (zeros of width g0>=W+1 on each side) makes every
    3x3 tap a static lane-slice; out-of-image taps read guard zeros, except
    the left/right row-wraparound taps which are killed by the m0/m2 masks
    (m0 zeroes source column W-1, used by dw==0 taps; m2 zeroes source
    column 0, used by dw==2 taps).
    """
    Lx = H * W
    Cin = x_ref.shape[1]
    Cmid = w1_ref.shape[0]
    # Tap t = dh*3+dw reads flat pixel q + (dh-1)*W + (dw-1); in guard-buffer
    # coordinates that is a slice starting at:
    offs = tuple(g0 + (dh - 1) * W + (dw - 1)
                 for dh in range(3) for dw in range(3))

    m0 = m0_ref[...]                                   # (1, Lg) bf16
    m2 = m2_ref[...]                                   # (1, Lg) bf16

    def build_slab(data_bf16):
        """data_bf16: (C, Lx) valid pixels -> im2col slab (9*C, Lxr)."""
        C = data_bf16.shape[0]
        guarded = jnp.concatenate(
            [jnp.zeros((C, g0), jnp.bfloat16),
             data_bf16,
             jnp.zeros((C, Lg - g0 - Lx), jnp.bfloat16)], axis=1)   # (C, Lg)
        g_dw0 = guarded * m0        # sources for left-neighbour taps
        g_dw2 = guarded * m2        # sources for right-neighbour taps
        pieces = []
        # TODO(synk): if these unaligned lane slices lower to masked-load
        # chains, switch to pltpu.roll (XLU slot) per the perf review.
        for t, o in enumerate(offs):
            dw = t % 3
            src = g_dw0 if dw == 0 else (g_dw2 if dw == 2 else guarded)
            pieces.append(src[:, o:o + Lxr])
        return jnp.concatenate(pieces, axis=0)         # (9*C, Lxr) bf16

    # ---- conv1 (3x3, "same") as one im2col matmul + folded BN + ReLU ----
    x = x_ref[0].astype(jnp.bfloat16)                  # (Cin, Lx)
    slab1 = build_slab(x)                              # (9*Cin, Lxr)
    acc1 = jnp.dot(w1_ref[...], slab1,
                   preferred_element_type=jnp.float32)  # (Cmid, Lxr) f32
    h1 = jnp.maximum(acc1 + b1_ref[...], 0.0)

    # ---- conv2 (3x3, "same") on the mid activations ----
    # Keep only the Lx valid lanes (lanes >= Lx hold relu(bias) garbage and
    # must not leak into conv2's bottom-row taps).
    slab2 = build_slab(h1[:, :Lx].astype(jnp.bfloat16))  # (9*Cmid, Lxr)
    acc2 = jnp.dot(w2_ref[...], slab2,
                   preferred_element_type=jnp.float32)   # (Cout, Lxr) f32
    o_ref[0, :, :] = jnp.maximum(acc2 + b2_ref[...], 0.0)


# ----------------------------------------------------------------------------
# JAX glue
# ----------------------------------------------------------------------------
def _bilinear_upsample_2x(x):
    """nn.Upsample(scale_factor=2, mode='bilinear', align_corners=True), NCHW."""
    def lerp(v, axis):
        n_in = v.shape[axis]
        n_out = 2 * n_in
        if n_in == 1:
            return jnp.repeat(v, 2, axis=axis)
        pos = jnp.arange(n_out, dtype=jnp.float32) * (n_in - 1) / (n_out - 1)
        i0 = jnp.floor(pos).astype(jnp.int32)
        i1 = jnp.minimum(i0 + 1, n_in - 1)
        frac = pos - i0.astype(jnp.float32)
        v0 = jnp.take(v, i0, axis=axis)
        v1 = jnp.take(v, i1, axis=axis)
        shape = [1] * v.ndim
        shape[axis] = n_out
        frac = frac.reshape(shape)
        return v0 * (1.0 - frac) + v1 * frac

    x = lerp(x, 2)
    x = lerp(x, 3)
    return x


def _pad_and_concat(x1, x2):
    x1u = _bilinear_upsample_2x(x1)
    diffY = x2.shape[2] - x1u.shape[2]
    diffX = x2.shape[3] - x1u.shape[3]
    x1u = jnp.pad(x1u, ((0, 0), (0, 0),
                        (diffY // 2, diffY - diffY // 2),
                        (diffX // 2, diffX - diffX // 2)))
    return jnp.concatenate([x2, x1u], axis=1)      # NCHW


def _round_up(x, m):
    return ((x + m - 1) // m) * m


def up_forward_pallas(x1, x2, params):
    x = _pad_and_concat(x1, x2)                    # (N, Cin, H, W) f32
    N, Cin, H, W = x.shape
    Lx = H * W
    Lxr = _round_up(Lx, 128)                       # lane-dense output width
    g0 = _round_up(W + 1, 128)                     # 128-aligned guard width
    Lg = 2 * g0 + Lxr                              # guard-buffer width

    x_flat = x.reshape(N, Cin, Lx)                 # free reshape, no HBM copy

    w1b, w2b = params["w1_bf16"], params["w2_bf16"]
    b1, b2 = params["b1"], params["b2"]
    Cmid, Cout = w1b.shape[0], w2b.shape[0]

    # Loop-invariant column masks (guard-buffer coordinates), host-computed.
    idx = np.arange(Lg)
    col = (idx - g0) % W
    in_data = (idx >= g0) & (idx < g0 + Lx)
    m0 = jnp.asarray(np.where(in_data & (col == W - 1), 0.0, 1.0),
                     dtype=jnp.bfloat16).reshape(1, Lg)
    m2 = jnp.asarray(np.where(in_data & (col == 0), 0.0, 1.0),
                     dtype=jnp.bfloat16).reshape(1, Lg)

    kernel = functools.partial(_up_double_conv_kernel,
                               H=H, W=W, g0=g0, Lg=Lg, Lxr=Lxr)
    out_flat = pl.pallas_call(
        kernel,
        out_shape=jax.ShapeDtypeStruct((N, Cout, Lxr), jnp.float32),
        grid_spec=pltpu.PrefetchScalarGridSpec(
            num_scalar_prefetch=0,
            grid=(N,),
            in_specs=[
                pl.BlockSpec((1, Cin, Lx), lambda n: (n, 0, 0)),     # x
                pl.BlockSpec((1, Lg), lambda n: (0, 0)),             # m0
                pl.BlockSpec((1, Lg), lambda n: (0, 0)),             # m2
                pl.BlockSpec((Cmid, 9 * Cin), lambda n: (0, 0)),     # w1 (bf16)
                pl.BlockSpec((Cmid, 1), lambda n: (0, 0)),           # b1
                pl.BlockSpec((Cout, 9 * Cmid), lambda n: (0, 0)),    # w2 (bf16)
                pl.BlockSpec((Cout, 1), lambda n: (0, 0)),           # b2
            ],
            out_specs=pl.BlockSpec((1, Cout, Lxr), lambda n: (n, 0, 0)),
        ),
        compiler_params=pltpu.CompilerParams(
            dimension_semantics=("parallel",),
            vmem_limit_bytes=32 * 1024 * 1024),
    )(x_flat, m0, m2, w1b, b1, w2b, b2)

    # Drop the (<128) lane-padding and reshape back to NCHW -- no pad, no
    # column slice, no transpose.
    return out_flat[:, :, :Lx].reshape(N, Cout, H, W)


# ----------------------------------------------------------------------------
# Deterministic parameter construction (Conv2d + BatchNorm2d, BN folded)
# ----------------------------------------------------------------------------
def init_params(in_channels, out_channels, key):
    mid = in_channels // 2
    eps = 1e-5
    ks = jax.random.split(key, 8)
    # Conv weights in PyTorch OIHW layout.
    w1 = 0.1 * jax.random.normal(ks[0], (mid, in_channels, 3, 3), jnp.float32)
    cb1 = 0.1 * jax.random.normal(ks[1], (mid,), jnp.float32)
    g1 = 1.0 + 0.1 * jax.random.normal(ks[2], (mid,), jnp.float32)
    be1 = 0.1 * jax.random.normal(ks[3], (mid,), jnp.float32)
    w2 = 0.1 * jax.random.normal(ks[4], (out_channels, mid, 3, 3), jnp.float32)
    cb2 = 0.1 * jax.random.normal(ks[5], (out_channels,), jnp.float32)
    g2 = 1.0 + 0.1 * jax.random.normal(ks[6], (out_channels,), jnp.float32)
    be2 = 0.1 * jax.random.normal(ks[7], (out_channels,), jnp.float32)

    # TODO(synk): BatchNorm is applied with inference-mode running statistics
    # (running_mean=0, running_var=1); training-mode batch statistics are not
    # reproduced.
    rm1, rv1 = jnp.zeros((mid,)), jnp.ones((mid,))
    rm2, rv2 = jnp.zeros((out_channels,)), jnp.ones((out_channels,))
    s1 = g1 / jnp.sqrt(rv1 + eps)
    b1 = be1 + s1 * (cb1 - rm1)
    s2 = g2 / jnp.sqrt(rv2 + eps)
    b2 = be2 + s2 * (cb2 - rm2)

    # Kernel weight layout: OIHW -> (O, 9*I), tap-major columns (t = dh*3+dw)
    # matching the im2col slab ordering; BN scale folded in; cast to bf16 once.
    w1_2d = jnp.transpose(w1, (0, 2, 3, 1)).reshape(mid, 9 * in_channels)
    w2_2d = jnp.transpose(w2, (0, 2, 3, 1)).reshape(out_channels, 9 * mid)
    w1_bf16 = (w1_2d * s1.reshape(-1, 1)).astype(jnp.bfloat16)
    w2_bf16 = (w2_2d * s2.reshape(-1, 1)).astype(jnp.bfloat16)
    return dict(w1=w1, w2=w2, w1_bf16=w1_bf16, w2_bf16=w2_bf16,
                s1=s1, s2=s2,
                b1=b1.reshape(-1, 1), b2=b2.reshape(-1, 1))


# ----------------------------------------------------------------------------
# Pure-JAX reference (for correctness check only; full f32 precision)
# ----------------------------------------------------------------------------
def up_forward_reference(x1, x2, params):
    x = _pad_and_concat(x1, x2)

    def conv_bn_relu(x, w, s, b):
        y = lax.conv_general_dilated(
            x, w, (1, 1), ((1, 1), (1, 1)),
            dimension_numbers=('NCHW', 'OIHW', 'NCHW'),
            precision=lax.Precision.HIGHEST)
        y = y * s.reshape(1, -1, 1, 1) + b.reshape(1, -1, 1, 1)
        return jnp.maximum(y, 0.0)

    x = conv_bn_relu(x, params["w1"], params["s1"], params["b1"])
    x = conv_bn_relu(x, params["w2"], params["s2"], params["b2"])
    return x


if __name__ == "__main__":
    key = jax.random.PRNGKey(0)
    k1, k2, kp = jax.random.split(key, 3)

    in_channels, out_channels = 8, 8
    N, H1, W1 = 2, 8, 8
    # x1 comes from the deeper decoder level (half channels, half spatial size);
    # x2 is the skip connection.
    x1 = jax.random.normal(k1, (N, in_channels // 2, H1, W1), jnp.float32)
    x2 = jax.random.normal(k2, (N, in_channels // 2, 2 * H1, 2 * W1), jnp.float32)
    params = init_params(in_channels, out_channels, kp)

    out = up_forward_pallas(x1, x2, params)
    out = jax.block_until_ready(out)

    ref = up_forward_reference(x1, x2, params)
    # Tolerance accounts for the intentional bf16 MXU operands (weights with
    # folded BN scale + im2col slabs) vs. the f32 HIGHEST-precision reference.
    np.testing.assert_allclose(np.asarray(out), np.asarray(ref),
                               rtol=2e-2, atol=1e-2)
    print("KERNEL_OK")
</pallas_src>

<mosaic_0001>
module attributes {stable_mosaic.version = 11 : i64} {
  func.func @_up_double_conv_kernel(%arg0: i32, %arg1: memref<1x8x256xf32, #tpu.memory_space<vmem>>, %arg2: memref<1x512xbf16, #tpu.memory_space<vmem>>, %arg3: memref<1x512xbf16, #tpu.memory_space<vmem>>, %arg4: memref<4x72xbf16, #tpu.memory_space<vmem>>, %arg5: memref<4x1xf32, #tpu.memory_space<vmem>>, %arg6: memref<8x36xbf16, #tpu.memory_space<vmem>>, %arg7: memref<8x1xf32, #tpu.memory_space<vmem>>, %arg8: memref<1x8x256xf32, #tpu.memory_space<vmem>>) attributes {dimension_semantics = [#tpu.dimension_semantics<parallel>], iteration_bounds = array<i64: 2>, scalar_prefetch = 0 : i64, scratch_operands = 0 : i64, tpu.core_type = #tpu.core_type<tc>, window_params = [{transform_indices = @transform_0, window_bounds = array<i64: 1, 8, 256>}, {pipeline_mode = #tpu.pipeline_mode<synchronous>, transform_indices = @transform_1, window_bounds = array<i64: 1, 512>}, {pipeline_mode = #tpu.pipeline_mode<synchronous>, transform_indices = @transform_2, window_bounds = array<i64: 1, 512>}, {pipeline_mode = #tpu.pipeline_mode<synchronous>, transform_indices = @transform_3, window_bounds = array<i64: 4, 72>}, {pipeline_mode = #tpu.pipeline_mode<synchronous>, transform_indices = @transform_4, window_bounds = array<i64: 4, 1>}, {pipeline_mode = #tpu.pipeline_mode<synchronous>, transform_indices = @transform_5, window_bounds = array<i64: 8, 36>}, {pipeline_mode = #tpu.pipeline_mode<synchronous>, transform_indices = @transform_6, window_bounds = array<i64: 8, 1>}, {transform_indices = @transform_7, window_bounds = array<i64: 1, 8, 256>}]} {
    %c0 = arith.constant 0 : index
    %c0_0 = arith.constant 0 : index
    %0 = vector.load %arg2[%c0, %c0_0] : memref<1x512xbf16, #tpu.memory_space<vmem>>, vector<1x512xbf16>
    %c0_1 = arith.constant 0 : index
    %c0_2 = arith.constant 0 : index
    %1 = vector.load %arg3[%c0_1, %c0_2] : memref<1x512xbf16, #tpu.memory_space<vmem>>, vector<1x512xbf16>
    %c0_3 = arith.constant 0 : index
    %c0_4 = arith.constant 0 : index
    %c0_5 = arith.constant 0 : index
    %2 = vector.load %arg1[%c0_3, %c0_4, %c0_5] : memref<1x8x256xf32, #tpu.memory_space<vmem>>, vector<1x8x256xf32>
    %3 = vector.shape_cast %2 : vector<1x8x256xf32> to vector<8x256xf32>
    %4 = arith.truncf %3 : vector<8x256xf32> to vector<8x256xbf16>
    %cst = arith.constant 0.000000e+00 : bf16
    %5 = vector.broadcast %cst : bf16 to vector<8x128xbf16>
    %cst_6 = arith.constant 0.000000e+00 : bf16
    %6 = vector.broadcast %cst_6 : bf16 to vector<8x128xbf16>
    %7 = tpu.concatenate %5, %4, %6 in 1 : vector<8x128xbf16>, vector<8x256xbf16>, vector<8x128xbf16> -> vector<8x512xbf16>
    %8 = vector.broadcast %0 : vector<1x512xbf16> to vector<8x512xbf16>
    %9 = arith.mulf %7, %8 : vector<8x512xbf16>
    %10 = vector.broadcast %1 : vector<1x512xbf16> to vector<8x512xbf16>
    %11 = arith.mulf %7, %10 : vector<8x512xbf16>
    %12 = vector.extract_strided_slice %9 {offsets = [0, 111], sizes = [8, 256], strides = [1, 1]} : vector<8x512xbf16> to vector<8x256xbf16>
    %13 = vector.extract_strided_slice %7 {offsets = [0, 112], sizes = [8, 256], strides = [1, 1]} : vector<8x512xbf16> to vector<8x256xbf16>
    %14 = vector.extract_strided_slice %11 {offsets = [0, 113], sizes = [8, 256], strides = [1, 1]} : vector<8x512xbf16> to vector<8x256xbf16>
    %15 = vector.extract_strided_slice %9 {offsets = [0, 127], sizes = [8, 256], strides = [1, 1]} : vector<8x512xbf16> to vector<8x256xbf16>
    %16 = vector.extract_strided_slice %7 {offsets = [0, 128], sizes = [8, 256], strides = [1, 1]} : vector<8x512xbf16> to vector<8x256xbf16>
    %17 = vector.extract_strided_slice %11 {offsets = [0, 129], sizes = [8, 256], strides = [1, 1]} : vector<8x512xbf16> to vector<8x256xbf16>
    %18 = vector.extract_strided_slice %9 {offsets = [0, 143], sizes = [8, 256], strides = [1, 1]} : vector<8x512xbf16> to vector<8x256xbf16>
    %19 = vector.extract_strided_slice %7 {offsets = [0, 144], sizes = [8, 256], strides = [1, 1]} : vector<8x512xbf16> to vector<8x256xbf16>
    %20 = vector.extract_strided_slice %11 {offsets = [0, 145], sizes = [8, 256], strides = [1, 1]} : vector<8x512xbf16> to vector<8x256xbf16>
    %21 = tpu.concatenate %12, %13, %14, %15, %16, %17, %18, %19, %20 in 0 : vector<8x256xbf16>, vector<8x256xbf16>, vector<8x256xbf16>, vector<8x256xbf16>, vector<8x256xbf16>, vector<8x256xbf16>, vector<8x256xbf16>, vector<8x256xbf16>, vector<8x256xbf16> -> vector<72x256xbf16>
    %c0_7 = arith.constant 0 : index
    %c0_8 = arith.constant 0 : index
    %22 = vector.load %arg4[%c0_7, %c0_8] : memref<4x72xbf16, #tpu.memory_space<vmem>>, vector<4x72xbf16>
    %cst_9 = arith.constant dense<0.000000e+00> : vector<4x256xf32>
    %23 = tpu.matmul %22, %21, %cst_9 {dimension_numbers = #tpu.dot_dimension_numbers<[1], [0], [0], [1], [0, 0, 1, 1], [], []>} : vector<4x72xbf16>, vector<72x256xbf16>, vector<4x256xf32> -> vector<4x256xf32>
    %c0_10 = arith.constant 0 : index
    %c0_11 = arith.constant 0 : index
    %24 = vector.load %arg5[%c0_10, %c0_11] : memref<4x1xf32, #tpu.memory_space<vmem>>, vector<4x1xf32>
    %25 = vector.broadcast %24 : vector<4x1xf32> to vector<4x256xf32>
    %26 = arith.addf %23, %25 : vector<4x256xf32>
    %cst_12 = arith.constant 0.000000e+00 : f32
    %27 = vector.broadcast %cst_12 : f32 to vector<4x256xf32>
    %28 = arith.maximumf %26, %27 : vector<4x256xf32>
    %29 = arith.truncf %28 : vector<4x256xf32> to vector<4x256xbf16>
    %cst_13 = arith.constant 0.000000e+00 : bf16
    %30 = vector.broadcast %cst_13 : bf16 to vector<4x128xbf16>
    %cst_14 = arith.constant 0.000000e+00 : bf16
    %31 = vector.broadcast %cst_14 : bf16 to vector<4x128xbf16>
    %32 = tpu.concatenate %30, %29, %31 in 1 : vector<4x128xbf16>, vector<4x256xbf16>, vector<4x128xbf16> -> vector<4x512xbf16>
    %33 = vector.broadcast %0 : vector<1x512xbf16> to vector<4x512xbf16>
    %34 = arith.mulf %32, %33 : vector<4x512xbf16>
    %35 = vector.broadcast %1 : vector<1x512xbf16> to vector<4x512xbf16>
    %36 = arith.mulf %32, %35 : vector<4x512xbf16>
    %37 = vector.extract_strided_slice %34 {offsets = [0, 111], sizes = [4, 256], strides = [1, 1]} : vector<4x512xbf16> to vector<4x256xbf16>
    %38 = vector.extract_strided_slice %32 {offsets = [0, 112], sizes = [4, 256], strides = [1, 1]} : vector<4x512xbf16> to vector<4x256xbf16>
    %39 = vector.extract_strided_slice %36 {offsets = [0, 113], sizes = [4, 256], strides = [1, 1]} : vector<4x512xbf16> to vector<4x256xbf16>
    %40 = vector.extract_strided_slice %34 {offsets = [0, 127], sizes = [4, 256], strides = [1, 1]} : vector<4x512xbf16> to vector<4x256xbf16>
    %41 = vector.extract_strided_slice %32 {offsets = [0, 128], sizes = [4, 256], strides = [1, 1]} : vector<4x512xbf16> to vector<4x256xbf16>
    %42 = vector.extract_strided_slice %36 {offsets = [0, 129], sizes = [4, 256], strides = [1, 1]} : vector<4x512xbf16> to vector<4x256xbf16>
    %43 = vector.extract_strided_slice %34 {offsets = [0, 143], sizes = [4, 256], strides = [1, 1]} : vector<4x512xbf16> to vector<4x256xbf16>
    %44 = vector.extract_strided_slice %32 {offsets = [0, 144], sizes = [4, 256], strides = [1, 1]} : vector<4x512xbf16> to vector<4x256xbf16>
    %45 = vector.extract_strided_slice %36 {offsets = [0, 145], sizes = [4, 256], strides = [1, 1]} : vector<4x512xbf16> to vector<4x256xbf16>
    %46 = tpu.concatenate %37, %38, %39, %40, %41, %42, %43, %44, %45 in 0 : vector<4x256xbf16>, vector<4x256xbf16>, vector<4x256xbf16>, vector<4x256xbf16>, vector<4x256xbf16>, vector<4x256xbf16>, vector<4x256xbf16>, vector<4x256xbf16>, vector<4x256xbf16> -> vector<36x256xbf16>
    %c0_15 = arith.constant 0 : index
    %c0_16 = arith.constant 0 : index
    %47 = vector.load %arg6[%c0_15, %c0_16] : memref<8x36xbf16, #tpu.memory_space<vmem>>, vector<8x36xbf16>
    %cst_17 = arith.constant dense<0.000000e+00> : vector<8x256xf32>
    %48 = tpu.matmul %47, %46, %cst_17 {dimension_numbers = #tpu.dot_dimension_numbers<[1], [0], [0], [1], [0, 0, 1, 1], [], []>} : vector<8x36xbf16>, vector<36x256xbf16>, vector<8x256xf32> -> vector<8x256xf32>
    %c0_18 = arith.constant 0 : index
    %c0_19 = arith.constant 0 : index
    %49 = vector.load %arg7[%c0_18, %c0_19] : memref<8x1xf32, #tpu.memory_space<vmem>>, vector<8x1xf32>
    %50 = vector.broadcast %49 : vector<8x1xf32> to vector<8x256xf32>
    %51 = arith.addf %48, %50 : vector<8x256xf32>
    %cst_20 = arith.constant 0.000000e+00 : f32
    %52 = vector.broadcast %cst_20 : f32 to vector<8x256xf32>
    %53 = arith.maximumf %51, %52 : vector<8x256xf32>
    %c0_21 = arith.constant 0 : index
    %c0_22 = arith.constant 0 : index
    %c0_23 = arith.constant 0 : index
    %54 = vector.load %arg8[%c0_21, %c0_22, %c0_23] : memref<1x8x256xf32, #tpu.memory_space<vmem>>, vector<1x8x256xf32>
    %55 = vector.shape_cast %54 : vector<1x8x256xf32> to vector<8x256xf32>
    %56 = vector.shape_cast %53 : vector<8x256xf32> to vector<1x8x256xf32>
    tpu.vector_store %arg8[%c0_21, %c0_22, %c0_23], %56 {strides = array<i32>} : memref<1x8x256xf32, #tpu.memory_space<vmem>>, vector<1x8x256xf32>,
    return
  }
  func.func @transform_0(%arg0: i32) -> (i32, i32, i32) {
    %c0_i32 = arith.constant 0 : i32
    %c0_i32_0 = arith.constant 0 : i32
    %c0_i32_1 = arith.constant 0 : i32
    return %arg0, %c0_i32, %c0_i32_0 : i32, i32, i32
  }
  func.func @transform_1(%arg0: i32) -> (i32, i32) {
    %c0_i32 = arith.constant 0 : i32
    %c0_i32_0 = arith.constant 0 : i32
    %c0_i32_1 = arith.constant 0 : i32
    return %c0_i32, %c0_i32_0 : i32, i32
  }
  func.func @transform_2(%arg0: i32) -> (i32, i32) {
    %c0_i32 = arith.constant 0 : i32
    %c0_i32_0 = arith.constant 0 : i32
    %c0_i32_1 = arith.constant 0 : i32
    return %c0_i32, %c0_i32_0 : i32, i32
  }
  func.func @transform_3(%arg0: i32) -> (i32, i32) {
    %c0_i32 = arith.constant 0 : i32
    %c0_i32_0 = arith.constant 0 : i32
    %c0_i32_1 = arith.constant 0 : i32
    return %c0_i32, %c0_i32_0 : i32, i32
  }
  func.func @transform_4(%arg0: i32) -> (i32, i32) {
    %c0_i32 = arith.constant 0 : i32
    %c0_i32_0 = arith.constant 0 : i32
    %c0_i32_1 = arith.constant 0 : i32
    return %c0_i32, %c0_i32_0 : i32, i32
  }
  func.func @transform_5(%arg0: i32) -> (i32, i32) {
    %c0_i32 = arith.constant 0 : i32
    %c0_i32_0 = arith.constant 0 : i32
    %c0_i32_1 = arith.constant 0 : i32
    return %c0_i32, %c0_i32_0 : i32, i32
  }
  func.func @transform_6(%arg0: i32) -> (i32, i32) {
    %c0_i32 = arith.constant 0 : i32
    %c0_i32_0 = arith.constant 0 : i32
    %c0_i32_1 = arith.constant 0 : i32
    return %c0_i32, %c0_i32_0 : i32, i32
  }
  func.func @transform_7(%arg0: i32) -> (i32, i32, i32) {
    %c0_i32 = arith.constant 0 : i32
    %c0_i32_0 = arith.constant 0 : i32
    %c0_i32_1 = arith.constant 0 : i32
    return %arg0, %c0_i32, %c0_i32_0 : i32, i32, i32
  }
}

</mosaic_0001>

<llo_original>
// kernel: tpu_custom_call.1
$region0: #{tpu_custom_call.1}
  #allocation0 [shape = 'u32[]', space=smem, size = 0x4, offset = 0x4, fixed_abs, tag = 'smem constant byte address 0x4 - core index']
  #allocation1 [shape = 'u32[144,128]{1,0:T(1,128)}', space=vmem, size = 0x12000, scoped, tag = 'internal scratch']
  %s0 = inlined_call_operand.hbm [shape: f32[2,8,256], index: 0, kind: input, shape index: {}]
  %s1 = inlined_call_operand.vmem [shape: bf16[1,512], index: 1, kind: input, shape index: {}]
  %s2 = inlined_call_operand.vmem [shape: bf16[1,512], index: 2, kind: input, shape index: {}]
  %s3 = inlined_call_operand.vmem [shape: bf16[4,72], index: 3, kind: input, shape index: {}]
  %s4 = inlined_call_operand.vmem [shape: f32[4,1], index: 4, kind: input, shape index: {}]
  %s5 = inlined_call_operand.vmem [shape: bf16[8,36], index: 5, kind: input, shape index: {}]
  %s6 = inlined_call_operand.vmem [shape: f32[8,1], index: 6, kind: input, shape index: {}]
  %s7 = inlined_call_operand.hbm [shape: f32[2,8,256], index: 7, kind: output, shape index: {}]
  %s8 = sld [smem:[#allocation0]]
  $region65: #{tpu_custom_call.1} parent=0
    _
  %s10 = ssub.s32 1, %s8
  %s11 = scalar_select 0, %s10, %s8
  $region1: #{tpu_custom_call.1} parent=0
    #allocation2 [shape = 'u8[16384]{0}', space=vmem, size = 0x4000, scoped, tag = 'input window, operand 0']
    #allocation3 [shape = 's32[2]{0}', space=sflag, size = 0x8, scoped, tag = 'scoped memory for tpu_custom_call.1']
    #allocation4 [shape = 's32[2]{0}', space=sflag, size = 0x8, scoped, tag = 'scoped memory for tpu_custom_call.1']
    #allocation5 [shape = 'u8[16384]{0}', space=vmem, size = 0x4000, scoped, tag = 'output window, operand 0']
    %12 = vsyncpa [#allocation3], 0
    %s13 = scalar_lea.sflag [#allocation3], 1
    %14 = vsyncpa %s13, 0
    %15 = vsyncpa [#allocation4], 0
    %s16 = scalar_lea.sflag [#allocation4], 1
    %17 = vsyncpa %s16, 0
    loop: start=0, step=1, limit=4
    $region2: #{tpu_custom_call.1} parent=1 // loop_pre_header
      _
    $region3: #{tpu_custom_call.1} parent=1 // loop_header
      %s19 = sphi 0, %s23
      %p20 = scmp.ge.s32.totalorder %s19, 4
      %s29 = sphi 0, %s31
      %s32 = sphi 0, %s29
      %s33 = sphi 0, %s32
      %s49 = sphi 0, %s33
      %s53 = sphi 0, %s53
      %s55 = sphi 0, %s53
      %s56 = sphi 0, %s55
      %s70 = sphi 0, %s56
      %s74 = sphi 0, %s74
      %s76 = sphi 0, %s74
      %s77 = sphi 0, %s76
      %s91 = sphi 0, %s77
      %s95 = sphi 0, %s95
      %s97 = sphi 0, %s95
      %s98 = sphi 0, %s97
      %s112 = sphi 0, %s98
      %s116 = sphi 0, %s116
      %s118 = sphi 0, %s116
      %s119 = sphi 0, %s118
      %s133 = sphi 0, %s119
      %s137 = sphi 0, %s137
      %s139 = sphi 0, %s137
      %s140 = sphi 0, %s139
      %s154 = sphi 0, %s140
      %s158 = sphi 0, %s158
      %s160 = sphi 0, %s158
      %s161 = sphi 0, %s160
      %s175 = sphi 0, %s161
      %s181 = sphi 0, %s183
      %s184 = sphi 0, %s181
      %s185 = sphi 0, %s184
      %s201 = sphi 0, %s185
    $region4: #{tpu_custom_call.1} parent=1 // loop_header_branch
      %22 = sbr.rel (%p20) target = $region8
    $region5: #{tpu_custom_call.1} parent=1 // loop_body
      %s24 = ssub.s32 %s19, 1
      %s25 = ssub.s32 %s19, 2
      %s26 = sadd.s32 %s19, 1
      %s27 = ssub.s32 %s19, %s26
      %p28 = scmp.eq.s32.totalorder %s27, 0
      %s30 = sadd.s32 %s29, 1
      %s31 = scalar_select %p28, %s29, %s30
      %p34 = pneg %p28
      %p35 = scmp.eq.s32.totalorder %s19, 1
      %p36 = por %p34, %p35
      %p37 = scmp.ne.s32.totalorder %s29, %s32
      %p38 = scmp.eq.s32.totalorder %s19, 0
      %p39 = por %p37, %p38
      %p40 = scmp.ne.s32.totalorder %s29, %s32
      %p41 = scmp.eq.s32.totalorder %s24, 1
      %p42 = por %p40, %p41
      %p43 = scmp.ne.s32.totalorder %s32, %s33
      %p44 = scmp.eq.s32.totalorder %s24, 0
      %p45 = por %p43, %p44
      %p46 = scmp.ne.s32.totalorder %s32, %s33
      %p47 = scmp.eq.s32.totalorder %s25, 1
      %p48 = por %p46, %p47
      %p50 = scmp.ne.s32.totalorder %s33, %s49
      %p51 = scmp.eq.s32.totalorder %s25, 0
      %p52 = por %p50, %p51
      %s54 = sadd.s32 %s53, 1
      %p57 = scmp.eq.s32.totalorder %s19, 1
      %p58 = scmp.ne.s32.totalorder %s53, %s55
      %p59 = scmp.eq.s32.totalorder %s19, 0
      %p60 = por %p58, %p59
      %p61 = scmp.ne.s32.totalorder %s53, %s55
      %p62 = scmp.eq.s32.totalorder %s24, 1
      %p63 = por %p61, %p62
      %p64 = scmp.ne.s32.totalorder %s55, %s56
      %p65 = scmp.eq.s32.totalorder %s24, 0
      %p66 = por %p64, %p65
      %p67 = scmp.ne.s32.totalorder %s55, %s56
      %p68 = scmp.eq.s32.totalorder %s25, 1
      %p69 = por %p67, %p68
      %p71 = scmp.ne.s32.totalorder %s56, %s70
      %p72 = scmp.eq.s32.totalorder %s25, 0
      %p73 = por %p71, %p72
      %s75 = sadd.s32 %s74, 1
      %p78 = scmp.eq.s32.totalorder %s19, 1
      %p79 = scmp.ne.s32.totalorder %s74, %s76
      %p80 = scmp.eq.s32.totalorder %s19, 0
      %p81 = por %p79, %p80
      %p82 = scmp.ne.s32.totalorder %s74, %s76
      %p83 = scmp.eq.s32.totalorder %s24, 1
      %p84 = por %p82, %p83
      %p85 = scmp.ne.s32.totalorder %s76, %s77
      %p86 = scmp.eq.s32.totalorder %s24, 0
      %p87 = por %p85, %p86
      %p88 = scmp.ne.s32.totalorder %s76, %s77
      %p89 = scmp.eq.s32.totalorder %s25, 1
      %p90 = por %p88, %p89
      %p92 = scmp.ne.s32.totalorder %s77, %s91
      %p93 = scmp.eq.s32.totalorder %s25, 0
      %p94 = por %p92, %p93
      %s96 = sadd.s32 %s95, 1
      %p99 = scmp.eq.s32.totalorder %s19, 1
      %p100 = scmp.ne.s32.totalorder %s95, %s97
      %p101 = scmp.eq.s32.totalorder %s19, 0
      %p102 = por %p100, %p101
      %p103 = scmp.ne.s32.totalorder %s95, %s97
      %p104 = scmp.eq.s32.totalorder %s24, 1
      %p105 = por %p103, %p104
      %p106 = scmp.ne.s32.totalorder %s97, %s98
      %p107 = scmp.eq.s32.totalorder %s24, 0
      %p108 = por %p106, %p107
      %p109 = scmp.ne.s32.totalorder %s97, %s98
      %p110 = scmp.eq.s32.totalorder %s25, 1
      %p111 = por %p109, %p110
      %p113 = scmp.ne.s32.totalorder %s98, %s112
      %p114 = scmp.eq.s32.totalorder %s25, 0
      %p115 = por %p113, %p114
      %s117 = sadd.s32 %s116, 1
      %p120 = scmp.eq.s32.totalorder %s19, 1
      %p121 = scmp.ne.s32.totalorder %s116, %s118
      %p122 = scmp.eq.s32.totalorder %s19, 0
      %p123 = por %p121, %p122
      %p124 = scmp.ne.s32.totalorder %s116, %s118
      %p125 = scmp.eq.s32.totalorder %s24, 1
      %p126 = por %p124, %p125
      %p127 = scmp.ne.s32.totalorder %s118, %s119
      %p128 = scmp.eq.s32.totalorder %s24, 0
      %p129 = por %p127, %p128
      %p130 = scmp.ne.s32.totalorder %s118, %s119
      %p131 = scmp.eq.s32.totalorder %s25, 1
      %p132 = por %p130, %p131
      %p134 = scmp.ne.s32.totalorder %s119, %s133
      %p135 = scmp.eq.s32.totalorder %s25, 0
      %p136 = por %p134, %p135
      %s138 = sadd.s32 %s137, 1
      %p141 = scmp.eq.s32.totalorder %s19, 1
      %p142 = scmp.ne.s32.totalorder %s137, %s139
      %p143 = scmp.eq.s32.totalorder %s19, 0
      %p144 = por %p142, %p143
      %p145 = scmp.ne.s32.totalorder %s137, %s139
      %p146 = scmp.eq.s32.totalorder %s24, 1
      %p147 = por %p145, %p146
      %p148 = scmp.ne.s32.totalorder %s139, %s140
      %p149 = scmp.eq.s32.totalorder %s24, 0
      %p150 = por %p148, %p149
      %p151 = scmp.ne.s32.totalorder %s139, %s140
      %p152 = scmp.eq.s32.totalorder %s25, 1
      %p153 = por %p151, %p152
      %p155 = scmp.ne.s32.totalorder %s140, %s154
      %p156 = scmp.eq.s32.totalorder %s25, 0
      %p157 = por %p155, %p156
      %s159 = sadd.s32 %s158, 1
      %p162 = scmp.eq.s32.totalorder %s19, 1
      %p163 = scmp.ne.s32.totalorder %s158, %s160
      %p164 = scmp.eq.s32.totalorder %s19, 0
      %p165 = por %p163, %p164
      %p166 = scmp.ne.s32.totalorder %s158, %s160
      %p167 = scmp.eq.s32.totalorder %s24, 1
      %p168 = por %p166, %p167
      %p169 = scmp.ne.s32.totalorder %s160, %s161
      %p170 = scmp.eq.s32.totalorder %s24, 0
      %p171 = por %p169, %p170
      %p172 = scmp.ne.s32.totalorder %s160, %s161
      %p173 = scmp.eq.s32.totalorder %s25, 1
      %p174 = por %p172, %p173
      %p176 = scmp.ne.s32.totalorder %s161, %s175
      %p177 = scmp.eq.s32.totalorder %s25, 0
      %p178 = por %p176, %p177
      %s179 = ssub.s32 %s19, %s26
      %p180 = scmp.eq.s32.totalorder %s179, 0
      %s182 = sadd.s32 %s181, 1
      %s183 = scalar_select %p180, %s181, %s182
      %p186 = pneg %p180
      %p187 = scmp.eq.s32.totalorder %s19, 1
      %p188 = por %p186, %p187
      %p189 = scmp.ne.s32.totalorder %s181, %s184
      %p190 = scmp.eq.s32.totalorder %s19, 0
      %p191 = por %p189, %p190
      %p192 = scmp.ne.s32.totalorder %s181, %s184
      %p193 = scmp.eq.s32.totalorder %s24, 1
      %p194 = por %p192, %p193
      %p195 = scmp.ne.s32.totalorder %s184, %s185
      %p196 = scmp.eq.s32.totalorder %s24, 0
      %p197 = por %p195, %p196
      %p198 = scmp.ne.s32.totalorder %s184, %s185
      %p199 = scmp.eq.s32.totalorder %s25, 1
      %p200 = por %p198, %p199
      %p202 = scmp.ne.s32.totalorder %s185, %s201
      %p203 = scmp.eq.s32.totalorder %s25, 0
      %p204 = por %p202, %p203
      %p205 = scmp.le.s32.totalorder 1, %s19
      %p206 = scmp.lt.s32.totalorder %s19, 3
      %p207 = pnand %p205, %p206
      %p208 = pneg %p207
      // Predicated region
      $region9: #{tpu_custom_call.1} parent=5 // pred_check
        _
      $region10: #{tpu_custom_call.1} parent=5 // pred_check_branch
        %210 = sbr.rel (%p207) target = $region12
      $region11: #{tpu_custom_call.1} parent=5 // pred_region
        %s211 = ssub.s32 %s19, 1
        // Predicated region
        $region13: #{tpu_custom_call.1} parent=11 // pred_check
          %p212 = pneg %p66
        $region14: #{tpu_custom_call.1} parent=11 // pred_check_branch
          %214 = sbr.rel (%p212) target = $region16
        $region15: #{tpu_custom_call.1} parent=11 // pred_region
          _
        $region16: #{tpu_custom_call.1} parent=11 // pred_fallthru
          _
        // Predicated region
        $region17: #{tpu_custom_call.1} parent=11 // pred_check
          %p215 = pneg %p87
        $region18: #{tpu_custom_call.1} parent=11 // pred_check_branch
          %217 = sbr.rel (%p215) target = $region20
        $region19: #{tpu_custom_call.1} parent=11 // pred_region
          _
        $region20: #{tpu_custom_call.1} parent=11 // pred_fallthru
          _
        // Predicated region
        $region21: #{tpu_custom_call.1} parent=11 // pred_check
          %p218 = pneg %p108
        $region22: #{tpu_custom_call.1} parent=11 // pred_check_branch
          %220 = sbr.rel (%p218) target = $region24
        $region23: #{tpu_custom_call.1} parent=11 // pred_region
          _
        $region24: #{tpu_custom_call.1} parent=11 // pred_fallthru
          _
        // Predicated region
        $region25: #{tpu_custom_call.1} parent=11 // pred_check
          %p221 = pneg %p129
        $region26: #{tpu_custom_call.1} parent=11 // pred_check_branch
          %223 = sbr.rel (%p221) target = $region28
        $region27: #{tpu_custom_call.1} parent=11 // pred_region
          _
        $region28: #{tpu_custom_call.1} parent=11 // pred_fallthru
          _
        // Predicated region
        $region29: #{tpu_custom_call.1} parent=11 // pred_check
          %p224 = pneg %p150
        $region30: #{tpu_custom_call.1} parent=11 // pred_check_branch
          %226 = sbr.rel (%p224) target = $region32
        $region31: #{tpu_custom_call.1} parent=11 // pred_region
          _
        $region32: #{tpu_custom_call.1} parent=11 // pred_fallthru
          _
        // Predicated region
        $region33: #{tpu_custom_call.1} parent=11 // pred_check
          %p227 = pneg %p171
        $region34: #{tpu_custom_call.1} parent=11 // pred_check_branch
          %229 = sbr.rel (%p227) target = $region36
        $region35: #{tpu_custom_call.1} parent=11 // pred_region
          _
        $region36: #{tpu_custom_call.1} parent=11 // pred_fallthru
          _
      $region12: #{tpu_custom_call.1} parent=5 // pred_fallthru
        _
      %p230 = scmp.lt.s32.totalorder %s19, 2
      // Predicated region
      $region37: #{tpu_custom_call.1} parent=5 // pred_check
        %p231 = pneg %p230
      $region38: #{tpu_custom_call.1} parent=5 // pred_check_branch
        %233 = sbr.rel (%p231) target = $region40
      $region39: #{tpu_custom_call.1} parent=5 // pred_region
        // Predicated region
        $region41: #{tpu_custom_call.1} parent=39 // pred_check
          %p234 = pneg %p39
        $region42: #{tpu_custom_call.1} parent=39 // pred_check_branch
          %236 = sbr.rel (%p234) target = $region44
        $region43: #{tpu_custom_call.1} parent=39 // pred_region
          %s237 = sand.u32 %s29, 1
          %s238 = scalar_lea.sflag [#allocation3], %s237
          %s239 = sand.u32 %s29, 1
          %s240 = smul.addr %s239, 16
          %s241 = scalar_lea.vmem [#allocation2], %s240
          %s243 = ssub.s32 256, 256
          %244 = vsyncadd %s238, %s243
          %s245 = smul.addr %s19, 2
          %s246 = smul.addr %s245, 128
          %s247 = scalar_lea.hbm %s0, %s246
          %s249 = sshll.u32 %s241, 4
          %s250 = int_to_ptr.vmem [resolvable:$true] %s249
          %252 = dma.hbm_to_vmem [thread:$0]  %s247, 256, %s250, %s238
        $region44: #{tpu_custom_call.1} parent=39 // pred_fallthru
          _
      $region40: #{tpu_custom_call.1} parent=5 // pred_fallthru
        _
      %p253 = scmp.le.s32.totalorder 1, %s19
      %p254 = scmp.lt.s32.totalorder %s19, 3
      %p255 = pnand %p253, %p254
      %p256 = pneg %p255
      // Predicated region
      $region45: #{tpu_custom_call.1} parent=5 // pred_check
        _
      $region46: #{tpu_custom_call.1} parent=5 // pred_check_branch
        %258 = sbr.rel (%p255) target = $region48
      $region47: #{tpu_custom_call.1} parent=5 // pred_region
        %s259 = ssub.s32 %s19, 1
        %s260 = sand.u32 %s32, 1
        %s261 = scalar_lea.sflag [#allocation3], %s260
        %s262 = sand.u32 %s32, 1
        %s263 = smul.addr %s262, 16
        %s264 = scalar_lea.vmem [#allocation2], %s263
        // Predicated region
        $region49: #{tpu_custom_call.1} parent=47 // pred_check
          %p265 = pneg %p45
        $region50: #{tpu_custom_call.1} parent=47 // pred_check_branch
          %267 = sbr.rel (%p265) target = $region52
        $region51: #{tpu_custom_call.1} parent=47 // pred_region
          %268 = dma.done %s261, 256
        $region52: #{tpu_custom_call.1} parent=47 // pred_fallthru
          _
        %s269 = sand.u32 %s32, 1
        %s270 = scalar_lea.sflag [#allocation3], %s269
        %s271 = sand.u32 %s32, 1
        %s272 = smul.addr %s271, 16
        %s273 = scalar_lea.vmem [#allocation2], %s272
        %p274 = pneg %p45
        %p275 = pneg %p42
        %p276 = pneg %p66
        %p277 = pneg %p63
        %p278 = pneg %p87
        %p279 = pneg %p84
        %p280 = pneg %p108
        %p281 = pneg %p105
        %p282 = pneg %p129
        %p283 = pneg %p126
        %p284 = pneg %p150
        %p285 = pneg %p147
        %p286 = pneg %p171
        %p287 = pneg %p168
        %p288 = pneg %p197
        %p289 = pneg %p194
        %s290 = sand.u32 %s184, 1
        %s291 = scalar_lea.sflag [#allocation4], %s290
        %s292 = sand.u32 %s184, 1
        %s293 = smul.addr %s292, 16
        %s294 = scalar_lea.vmem [#allocation5], %s293
        %v296 = vld [vmem:[%s1] sm:$0xf]
        %v297 = vld [vmem:[%s2] sm:$0xf]
        %v298 = vld [vmem:[%s264] sm:$0xff]
        %v299 = vld [vmem:[%s264 + $0x8] sm:$0xff]
        %v300 = vpack.c.bf16 %v298, %v298
        %v301 = vpack.c.bf16 %v299, %v299
        %v304 = vunpack.c.l.s4 1966171168
        %v305 = vunpack.c.0.s8 %v304
        %v306 = vlaneseq
        %v307 = vshrl.u32 %v306, 7
        %v308 = vsub.s32 %v305, %v307
        %v309 = vrot.slane %v296, %v308
        %v310 = vcombine.high %v309, %v309
        %v312 = vunpack.c.l.s4 1966171168
        %v313 = vunpack.c.0.s8 %v312
        %v314 = vlaneseq
        %v315 = vshrl.u32 %v314, 7
        %v316 = vsub.s32 %v313, %v315
        %v317 = vrot.slane %v309, %v316
        %v319 = vunpack.c.l.s4 1966171168
        %v320 = vunpack.c.0.s8 %v319
        %v321 = vlaneseq
        %v322 = vshrl.u32 %v321, 7
        %v323 = vsub.s32 %v320, %v322
        %v324 = vrot.slane %v310, %v323
        %v325 = vcombine.high %v317, %v317
        %v326 = vcombine.high %v324, %v324
        %v328 = vpack.i.b16 %v317, %v317
        %v330 = vlaneseq
        %v331 = vshrl.u32 %v330, 7
        %v332 = vsub.s32 0, %v331
        %v333 = vrot.slane %v328, %v332
        %v335 = vpack.i.b16 %v324, %v324
        %v337 = vlaneseq
        %v338 = vshrl.u32 %v337, 7
        %v339 = vsub.s32 0, %v338
        %v340 = vrot.slane %v335, %v339
        %v342 = vpack.i.b16 %v325, %v325
        %v344 = vlaneseq
        %v345 = vshrl.u32 %v344, 7
        %v346 = vsub.s32 0, %v345
        %v347 = vrot.slane %v342, %v346
        %v349 = vpack.i.b16 %v326, %v326
        %v351 = vlaneseq
        %v352 = vshrl.u32 %v351, 7
        %v353 = vsub.s32 0, %v352
        %v354 = vrot.slane %v349, %v353
        %v355 = vmul.bf16 %v333, 0
        %v356 = vmul.bf16 %v300, %v340
        %v357 = vmul.bf16 %v301, %v347
        %v358 = vmul.bf16 %v354, 0
        %v361 = vunpack.c.l.s4 1966171168
        %v362 = vunpack.c.0.s8 %v361
        %v363 = vlaneseq
        %v364 = vshrl.u32 %v363, 7
        %v365 = vsub.s32 %v362, %v364
        %v366 = vrot.slane %v297, %v365
        %v367 = vcombine.high %v366, %v366
        %v369 = vunpack.c.l.s4 1966171168
        %v370 = vunpack.c.0.s8 %v369
        %v371 = vlaneseq
        %v372 = vshrl.u32 %v371, 7
        %v373 = vsub.s32 %v370, %v372
        %v374 = vrot.slane %v366, %v373
        %v376 = vunpack.c.l.s4 1966171168
        %v377 = vunpack.c.0.s8 %v376
        %v378 = vlaneseq
        %v379 = vshrl.u32 %v378, 7
        %v380 = vsub.s32 %v377, %v379
        %v381 = vrot.slane %v367, %v380
        %v382 = vcombine.high %v374, %v374
        %v383 = vcombine.high %v381, %v381
        %v385 = vpack.i.b16 %v374, %v374
        %v387 = vlaneseq
        %v388 = vshrl.u32 %v387, 7
        %v389 = vsub.s32 0, %v388
        %v390 = vrot.slane %v385, %v389
        %v392 = vpack.i.b16 %v381, %v381
        %v394 = vlaneseq
        %v395 = vshrl.u32 %v394, 7
        %v396 = vsub.s32 0, %v395
        %v397 = vrot.slane %v392, %v396
        %v399 = vpack.i.b16 %v382, %v382
        %v401 = vlaneseq
        %v402 = vshrl.u32 %v401, 7
        %v403 = vsub.s32 0, %v402
        %v404 = vrot.slane %v399, %v403
        %v406 = vpack.i.b16 %v383, %v383
        %v408 = vlaneseq
        %v409 = vshrl.u32 %v408, 7
        %v410 = vsub.s32 0, %v409
        %v411 = vrot.slane %v406, %v410
        %v412 = vmul.bf16 %v390, 0
        %v413 = vmul.bf16 %v300, %v397
        %v414 = vmul.bf16 %v301, %v404
        %v415 = vmul.bf16 %v411, 0
        %v419 = vrot.slane 0, 4
        %v420 = vrot.slane %v300, 4
        %v421 = vrot.slane %v301, 4
        %422 = vrot.lane.b32.xlu0 %v419, 127
        %v423 = vpop.permute.xlu0 %422
        %424 = vrot.lane.b32.xlu0 %v420, 127
        %v425 = vpop.permute.xlu0 %424
        %426 = vrot.lane.b32.xlu0 %v421, 127
        %v427 = vpop.permute.xlu0 %426
        %vm428 = vcmask 1039360
        %v429 = vsel %vm428, %v423, %v425
        %v430 = vsel %vm428, %v425, %v427
        %434 = vrot.lane.b32.xlu0 %v412, 126
        %v435 = vpop.permute.xlu0 %434
        %436 = vrot.lane.b32.xlu0 %v413, 126
        %v437 = vpop.permute.xlu0 %436
        %438 = vrot.lane.b32.xlu0 %v414, 126
        %v439 = vpop.permute.xlu0 %438
        %vm440 = vcmask 1031168
        %v441 = vsel %vm440, %v435, %v437
        %v442 = vsel %vm440, %v437, %v439
        %v446 = vrot.slane %v355, 4
        %v447 = vrot.slane %v356, 4
        %v448 = vrot.slane %v357, 4
        %449 = vrot.lane.b32.xlu0 %v446, 112
        %v450 = vpop.permute.xlu0 %449
        %451 = vrot.lane.b32.xlu0 %v447, 112
        %v452 = vpop.permute.xlu0 %451
        %453 = vrot.lane.b32.xlu0 %v448, 112
        %v454 = vpop.permute.xlu0 %453
        %vm455 = vcmask 916480
        %v456 = vsel %vm455, %v450, %v452
        %v457 = vsel %vm455, %v452, %v454
        %458 = vrot.lane.b32.xlu0 %v300, 111
        %v459 = vpop.permute.xlu0 %458
        %460 = vrot.lane.b32.xlu0 %v301, 111
        %v461 = vpop.permute.xlu0 %460
        %vm462 = vcmask 908288
        %v463 = vsel %vm462, %v459, %v461
        %v465 = vrot.slane %v413, 4
        %v466 = vrot.slane %v414, 4
        %v467 = vrot.slane %v415, 4
        %468 = vrot.lane.b32.xlu0 %v465, 110
        %v469 = vpop.permute.xlu0 %468
        %470 = vrot.lane.b32.xlu0 %v466, 110
        %v471 = vpop.permute.xlu0 %470
        %472 = vrot.lane.b32.xlu0 %v467, 110
        %v473 = vpop.permute.xlu0 %472
        %vm474 = vcmask 900096
        %v475 = vsel %vm474, %v469, %v471
        %v476 = vsel %vm474, %v471, %v473
        %478 = vrot.lane.b32.xlu0 %v356, 96
        %v479 = vpop.permute.xlu0 %478
        %480 = vrot.lane.b32.xlu0 %v357, 96
        %v481 = vpop.permute.xlu0 %480
        %482 = vrot.lane.b32.xlu0 %v358, 96
        %v483 = vpop.permute.xlu0 %482
        %vm484 = vcmask 785408
        %v485 = vsel %vm484, %v479, %v481
        %v486 = vsel %vm484, %v481, %v483
        %487 = vrot.lane.b32.xlu0 %v420, 95
        %v488 = vpop.permute.xlu0 %487
        %489 = vrot.lane.b32.xlu0 %v421, 95
        %v490 = vpop.permute.xlu0 %489
        %491 = vrot.lane.b32.xlu0 %v419, 95
        %v492 = vpop.permute.xlu0 %491
        %vm493 = vcmask 777216
        %v494 = vsel %vm493, %v488, %v490
        %v495 = vsel %vm493, %v490, %v492
        %496 = vrot.lane.b32.xlu0 %v413, 94
        %v497 = vpop.permute.xlu0 %496
        %498 = vrot.lane.b32.xlu0 %v414, 94
        %v499 = vpop.permute.xlu0 %498
        %500 = vrot.lane.b32.xlu0 %v415, 94
        %v501 = vpop.permute.xlu0 %500
        %vm502 = vcmask 769024
        %v503 = vsel %vm502, %v497, %v499
        %v504 = vsel %vm502, %v499, %v501
        %vm505 = vcmask 1043456
        %v508 = vsel %vm505, %v355, %v429
        %v511 = vsel %vm505, %v356, %v430
        %v514 = vsel %vm505, %v357, %v427
        %v517 = vsel %vm505, %v441, %v456
        %v520 = vsel %vm505, %v442, %v457
        %v523 = vsel %vm505, %v439, %v454
        %v526 = vsel %vm505, %v459, %v469
        %v529 = vsel %vm505, %v463, %v475
        %v532 = vsel %vm505, %v461, %v476
        %v535 = vsel %vm505, %v479, %v488
        %v538 = vsel %vm505, %v485, %v494
        %v541 = vsel %vm505, %v486, %v495
        %v542 = vld [vmem:[%s3] sm:$0x3]
        %v543 = vld [vmem:[%s4] sm:$0xf]
        %545 = vset.pattern.permute.xlu0 0
        %546 = vperm.xlu0 %545, %v543
        %v547 = vpop.permute.xlu0 %546
        %561 = vrot.lane.b32.xlu0 %v508, 17
        %v562 = vpop.permute.xlu0 %561
        %563 = vrot.lane.b32.xlu0 %v511, 17
        %v564 = vpop.permute.xlu0 %563
        %565 = vrot.lane.b32.xlu0 %v514, 17
        %v566 = vpop.permute.xlu0 %565
        %567 = vrot.lane.b32.xlu0 %v517, 17
        %v568 = vpop.permute.xlu0 %567
        %569 = vrot.lane.b32.xlu0 %v520, 17
        %v570 = vpop.permute.xlu0 %569
        %571 = vrot.lane.b32.xlu0 %v523, 17
        %v572 = vpop.permute.xlu0 %571
        %573 = vrot.lane.b32.xlu0 %v526, 17
        %v574 = vpop.permute.xlu0 %573
        %575 = vrot.lane.b32.xlu0 %v529, 17
        %v576 = vpop.permute.xlu0 %575
        %577 = vrot.lane.b32.xlu0 %v532, 17
        %v578 = vpop.permute.xlu0 %577
        %579 = vrot.lane.b32.xlu0 %v535, 17
        %v580 = vpop.permute.xlu0 %579
        %581 = vrot.lane.b32.xlu0 %v538, 17
        %v582 = vpop.permute.xlu0 %581
        %583 = vrot.lane.b32.xlu0 %v541, 17
        %v584 = vpop.permute.xlu0 %583
        %585 = vrot.lane.b32.xlu0 %v497, 17
        %v586 = vpop.permute.xlu0 %585
        %587 = vrot.lane.b32.xlu0 %v503, 17
        %v588 = vpop.permute.xlu0 %587
        %589 = vrot.lane.b32.xlu0 %v504, 17
        %v590 = vpop.permute.xlu0 %589
        %vm591 = vcmask 138240
        %v592 = vsel %vm591, %v562, %v564
        %v593 = vsel %vm591, %v564, %v566
        %v594 = vsel %vm591, %v568, %v570
        %v595 = vsel %vm591, %v570, %v572
        %v596 = vsel %vm591, %v574, %v576
        %v597 = vsel %vm591, %v576, %v578
        %v598 = vsel %vm591, %v580, %v582
        %v599 = vsel %vm591, %v582, %v584
        %v600 = vsel %vm591, %v586, %v588
        %v601 = vsel %vm591, %v588, %v590
        %vm610 = vcmask 588800
        %v612 = vsel %vm610, %v542, 0
        %v615 = vsel %vm505, %v600, 0
        %v618 = vsel %vm505, %v601, 0
        %620 = vmatprep.subr.bf16.mxu0 %v593
        %621 = vmatpush1.bf16.msra.mxu0 %v592
        %622 = vmatprep.subr.bf16.mxu0 %v595
        %623 = vmatpush1.bf16.msra.mxu0 %v594
        %624 = vmatprep.subr.bf16.mxu0 %v597
        %625 = vmatpush1.bf16.msra.mxu0 %v596
        %626 = vmatprep.subr.bf16.mxu0 %v599
        %627 = vmatpush1.bf16.msra.mxu0 %v598
        %628 = vmatprep.subr.bf16.mxu0 %v618
        %629 = vmatpush1.bf16.msra.mxu0 %v615
        %630 = vmatprep.subr.bf16.mxu0 0
        %631 = vmatpush1.bf16.msra.mxu0 0
        %632 = vmatprep.subr.bf16.mxu0 0
        %633 = vmatpush1.bf16.msra.mxu0 0
        %634 = vmatprep.subr.bf16.mxu0 0
        %635 = vmatpush1.bf16.msra.mxu0 0
        %636 = vmatprep.subr.bf16.mxu0 0
        %637 = vmatpush1.bf16.msra.mxu0 0
        %638 = vmatprep.subr.bf16.mxu0 0
        %639 = vmatpush1.bf16.msra.mxu0 0
        %640 = vmatprep.subr.bf16.mxu0 0
        %641 = vmatpush1.bf16.msra.mxu0 0
        %642 = vmatprep.subr.bf16.mxu0 0
        %643 = vmatpush1.bf16.msra.mxu0 0
        %644 = vmatprep.subr.bf16.mxu0 0
        %645 = vmatpush1.bf16.msra.mxu0 0
        %646 = vmatprep.subr.bf16.mxu0 0
        %647 = vmatpush1.bf16.msra.mxu0 0
        %648 = vmatprep.subr.bf16.mxu0 0
        %649 = vmatpush1.bf16.msra.mxu0 0
        %650 = vmatprep.subr.bf16.mxu0 0
        %651 = vmatpush1.bf16.msra.mxu0 0
        %652 = vmatprep.mubr.bf16.mxu0 0
        %653 = vmatmul.mubr.bf16.gmra.mrb[0].mxu0 %v612
        %v654 = vpop.f32.mrb[0].mxu0
        %v655 = vadd.f32 %v547, %v654
        %v656 = vpop.f32.mrb[0].mxu0
        %v657 = vadd.f32 %v547, %v656
        %v658 = vpop.f32.mrb[0].mxu0
        %v659 = vpop.f32.mrb[0].mxu0
        %660 = vdwg.mxu0
        %v661 = vmax.f32 %v655, 0.0
        %v662 = vmax.f32 %v657, 0.0
        %v663 = vpack.c.bf16 %v661, %v661
        %v664 = vpack.c.bf16 %v662, %v662
        %v665 = vmul.bf16 %v663, %v340
        %v666 = vmul.bf16 %v664, %v347
        %v667 = vmul.bf16 %v663, %v397
        %v668 = vmul.bf16 %v664, %v404
        %v671 = vrot.slane 0, 6
        %v672 = vrot.slane %v663, 6
        %v673 = vrot.slane %v664, 6
        %674 = vrot.lane.b32.xlu0 %v671, 127
        %v675 = vpop.permute.xlu0 %674
        %676 = vrot.lane.b32.xlu0 %v672, 127
        %v677 = vpop.permute.xlu0 %676
        %678 = vrot.lane.b32.xlu0 %v673, 127
        %v679 = vpop.permute.xlu0 %678
        %v680 = vsel %vm428, %v675, %v677
        %v681 = vsel %vm428, %v677, %v679
        %v684 = vrot.slane %v412, 4
        %v685 = vrot.slane %v667, 4
        %v686 = vrot.slane %v668, 4
        %687 = vrot.lane.b32.xlu0 %v684, 126
        %v688 = vpop.permute.xlu0 %687
        %689 = vrot.lane.b32.xlu0 %v685, 126
        %v690 = vpop.permute.xlu0 %689
        %691 = vrot.lane.b32.xlu0 %v686, 126
        %v692 = vpop.permute.xlu0 %691
        %v693 = vsel %vm440, %v688, %v690
        %v694 = vsel %vm440, %v690, %v692
        %v697 = vrot.slane %v355, 2
        %v698 = vrot.slane %v665, 2
        %v699 = vrot.slane %v666, 2
        %700 = vrot.lane.b32.xlu0 %v697, 112
        %v701 = vpop.permute.xlu0 %700
        %702 = vrot.lane.b32.xlu0 %v698, 112
        %v703 = vpop.permute.xlu0 %702
        %704 = vrot.lane.b32.xlu0 %v699, 112
        %v705 = vpop.permute.xlu0 %704
        %v706 = vsel %vm455, %v701, %v703
        %v707 = vsel %vm455, %v703, %v705
        %708 = vrot.lane.b32.xlu0 %v663, 111
        %v709 = vpop.permute.xlu0 %708
        %710 = vrot.lane.b32.xlu0 %v664, 111
        %v711 = vpop.permute.xlu0 %710
        %v712 = vsel %vm462, %v709, %v711
        %v713 = vrot.slane %v667, 6
        %v714 = vrot.slane %v668, 6
        %v715 = vrot.slane %v415, 6
        %716 = vrot.lane.b32.xlu0 %v713, 110
        %v717 = vpop.permute.xlu0 %716
        %718 = vrot.lane.b32.xlu0 %v714, 110
        %v719 = vpop.permute.xlu0 %718
        %720 = vrot.lane.b32.xlu0 %v715, 110
        %v721 = vpop.permute.xlu0 %720
        %v722 = vsel %vm474, %v717, %v719
        %v723 = vsel %vm474, %v719, %v721
        %v724 = vrot.slane %v665, 4
        %v725 = vrot.slane %v666, 4
        %v726 = vrot.slane %v358, 4
        %727 = vrot.lane.b32.xlu0 %v724, 96
        %v728 = vpop.permute.xlu0 %727
        %729 = vrot.lane.b32.xlu0 %v725, 96
        %v730 = vpop.permute.xlu0 %729
        %731 = vrot.lane.b32.xlu0 %v726, 96
        %v732 = vpop.permute.xlu0 %731
        %v733 = vsel %vm484, %v728, %v730
        %v734 = vsel %vm484, %v730, %v732
        %v735 = vrot.slane %v663, 2
        %v736 = vrot.slane %v664, 2
        %v737 = vrot.slane 0, 2
        %738 = vrot.lane.b32.xlu0 %v735, 95
        %v739 = vpop.permute.xlu0 %738
        %740 = vrot.lane.b32.xlu0 %v736, 95
        %v741 = vpop.permute.xlu0 %740
        %742 = vrot.lane.b32.xlu0 %v737, 95
        %v743 = vpop.permute.xlu0 %742
        %v744 = vsel %vm493, %v739, %v741
        %v745 = vsel %vm493, %v741, %v743
        %746 = vrot.lane.b32.xlu0 %v667, 94
        %v747 = vpop.permute.xlu0 %746
        %748 = vrot.lane.b32.xlu0 %v668, 94
        %v749 = vpop.permute.xlu0 %748
        %v750 = vsel %vm502, %v747, %v749
        %v751 = vsel %vm502, %v749, %v501
        %vm752 = vcmask 1041408
        %v754 = vsel %vm752, %v355, %v680
        %v757 = vsel %vm752, %v665, %v681
        %v760 = vsel %vm752, %v666, %v679
        %v762 = vsel %vm505, %v754, %v693
        %v764 = vsel %vm505, %v757, %v694
        %v766 = vsel %vm505, %v760, %v692
        %vm767 = vcmask 1045504
        %v769 = vsel %vm767, %v762, %v706
        %v771 = vsel %vm767, %v764, %v707
        %v773 = vsel %vm767, %v766, %v705
        %v776 = vsel %vm752, %v709, %v717
        %v779 = vsel %vm752, %v712, %v722
        %v782 = vsel %vm752, %v711, %v723
        %v784 = vsel %vm505, %v776, %v728
        %v786 = vsel %vm505, %v779, %v733
        %v788 = vsel %vm505, %v782, %v734
        %v790 = vsel %vm767, %v784, %v739
        %v792 = vsel %vm767, %v786, %v744
        %v794 = vsel %vm767, %v788, %v745
        %v795 = vld [vmem:[%s5] sm:$0xf]
        %v796 = vld [vmem:[%s6] sm:$0xff]
        %798 = vset.pattern.permute.xlu0 0
        %799 = vperm.xlu0 %798, %v796
        %v800 = vpop.permute.xlu0 %799
        %808 = vrot.lane.b32.xlu0 %v769, 17
        %v809 = vpop.permute.xlu0 %808
        %810 = vrot.lane.b32.xlu0 %v771, 17
        %v811 = vpop.permute.xlu0 %810
        %812 = vrot.lane.b32.xlu0 %v773, 17
        %v813 = vpop.permute.xlu0 %812
        %814 = vrot.lane.b32.xlu0 %v790, 17
        %v815 = vpop.permute.xlu0 %814
        %816 = vrot.lane.b32.xlu0 %v792, 17
        %v817 = vpop.permute.xlu0 %816
        %818 = vrot.lane.b32.xlu0 %v794, 17
        %v819 = vpop.permute.xlu0 %818
        %820 = vrot.lane.b32.xlu0 %v747, 17
        %v821 = vpop.permute.xlu0 %820
        %822 = vrot.lane.b32.xlu0 %v750, 17
        %v823 = vpop.permute.xlu0 %822
        %824 = vrot.lane.b32.xlu0 %v751, 17
        %v825 = vpop.permute.xlu0 %824
        %v826 = vsel %vm591, %v809, %v811
        %v827 = vsel %vm591, %v811, %v813
        %v828 = vsel %vm591, %v815, %v817
        %v829 = vsel %vm591, %v817, %v819
        %v830 = vsel %vm591, %v821, %v823
        %v831 = vsel %vm591, %v823, %v825
        %vm836 = vcmask 293888
        %v838 = vsel %vm836, %v795, 0
        %v841 = vsel %vm752, %v830, 0
        %v844 = vsel %vm752, %v831, 0
        %846 = vmatprep.subr.bf16.mxu0 %v827
        %847 = vmatpush1.bf16.msra.mxu0 %v826
        %848 = vmatprep.subr.bf16.mxu0 %v829
        %849 = vmatpush1.bf16.msra.mxu0 %v828
        %850 = vmatprep.subr.bf16.mxu0 %v844
        %851 = vmatpush1.bf16.msra.mxu0 %v841
        %852 = vmatprep.subr.bf16.mxu0 0
        %853 = vmatpush1.bf16.msra.mxu0 0
        %854 = vmatprep.subr.bf16.mxu0 0
        %855 = vmatpush1.bf16.msra.mxu0 0
        %856 = vmatprep.subr.bf16.mxu0 0
        %857 = vmatpush1.bf16.msra.mxu0 0
        %858 = vmatprep.subr.bf16.mxu0 0
        %859 = vmatpush1.bf16.msra.mxu0 0
        %860 = vmatprep.subr.bf16.mxu0 0
        %861 = vmatpush1.bf16.msra.mxu0 0
        %862 = vmatprep.subr.bf16.mxu0 0
        %863 = vmatpush1.bf16.msra.mxu0 0
        %864 = vmatprep.subr.bf16.mxu0 0
        %865 = vmatpush1.bf16.msra.mxu0 0
        %866 = vmatprep.subr.bf16.mxu0 0
        %867 = vmatpush1.bf16.msra.mxu0 0
        %868 = vmatprep.subr.bf16.mxu0 0
        %869 = vmatpush1.bf16.msra.mxu0 0
        %870 = vmatprep.subr.bf16.mxu0 0
        %871 = vmatpush1.bf16.msra.mxu0 0
        %872 = vmatprep.subr.bf16.mxu0 0
        %873 = vmatpush1.bf16.msra.mxu0 0
        %874 = vmatprep.subr.bf16.mxu0 0
        %875 = vmatpush1.bf16.msra.mxu0 0
        %876 = vmatprep.subr.bf16.mxu0 0
        %877 = vmatpush1.bf16.msra.mxu0 0
        %878 = vmatprep.mubr.bf16.mxu0 0
        %879 = vmatmul.mubr.bf16.gmra.mrb[0].mxu0 %v838
        %v880 = vpop.f32.mrb[0].mxu0
        %v881 = vadd.f32 %v800, %v880
        %v882 = vpop.f32.mrb[0].mxu0
        %v883 = vadd.f32 %v800, %v882
        %v884 = vpop.f32.mrb[0].mxu0
        %v885 = vpop.f32.mrb[0].mxu0
        %886 = vdwg.mxu0
        %v887 = vmax.f32 %v881, 0.0
        %v888 = vmax.f32 %v883, 0.0
        %889 = vst [vmem:[%s294] sm:$0xff] %v887
        %890 = vst [vmem:[%s294 + $0x8] sm:$0xff] %v888
        %s891 = sand.u32 %s184, 1
        %s892 = scalar_lea.sflag [#allocation4], %s891
        %s893 = sand.u32 %s184, 1
        %s894 = smul.addr %s893, 16
        %s895 = scalar_lea.vmem [#allocation5], %s894
        // Predicated region
        $region53: #{tpu_custom_call.1} parent=47 // pred_check
          %p896 = pneg %p194
        $region54: #{tpu_custom_call.1} parent=47 // pred_check_branch
          %898 = sbr.rel (%p896) target = $region56
        $region55: #{tpu_custom_call.1} parent=47 // pred_region
          %s900 = ssub.s32 256, 256
          %901 = vsyncadd %s892, %s900
          %s902 = smul.addr %s24, 2
          %s903 = smul.addr %s902, 128
          %s904 = scalar_lea.hbm %s7, %s903
          %s906 = sshll.u32 %s895, 4
          %s907 = int_to_ptr.vmem [resolvable:$true] %s906
          %909 = dma.vmem_to_hbm [thread:$0]  %s907, 256, %s904, %s892
        $region56: #{tpu_custom_call.1} parent=47 // pred_fallthru
          _
      $region48: #{tpu_custom_call.1} parent=5 // pred_fallthru
        _
      %p910 = scmp.le.s32.totalorder 2, %s19
      // Predicated region
      $region57: #{tpu_custom_call.1} parent=5 // pred_check
        %p911 = pneg %p910
      $region58: #{tpu_custom_call.1} parent=5 // pred_check_branch
        %913 = sbr.rel (%p911) target = $region60
      $region59: #{tpu_custom_call.1} parent=5 // pred_region
        %s914 = ssub.s32 %s19, 2
        // Predicated region
        $region61: #{tpu_custom_call.1} parent=59 // pred_check
          %p915 = pneg %p200
        $region62: #{tpu_custom_call.1} parent=59 // pred_check_branch
          %917 = sbr.rel (%p915) target = $region64
        $region63: #{tpu_custom_call.1} parent=59 // pred_region
          %s918 = sand.u32 %s185, 1
          %s919 = scalar_lea.sflag [#allocation4], %s918
          %s920 = sand.u32 %s185, 1
          %s921 = smul.addr %s920, 16
          %s922 = scalar_lea.vmem [#allocation5], %s921
          %923 = dma.done %s919, 256
        $region64: #{tpu_custom_call.1} parent=59 // pred_fallthru
          _
      $region60: #{tpu_custom_call.1} parent=5 // pred_fallthru
        _
    $region6: #{tpu_custom_call.1} parent=1 // loop_footer
      %s23 = sadd.s32 1, %s19
    $region7: #{tpu_custom_call.1} parent=1 // loop_footer_branch
      %18 = sbr.rel target = $region3
    $region8: #{tpu_custom_call.1} parent=1 // loop_exit
      _
    %924 = vsyncpa [#allocation3], 1
    %s925 = scalar_lea.sflag [#allocation3], 1
    %926 = vsyncpa %s925, 1
    %927 = vsyncpa [#allocation4], 1
    %s928 = scalar_lea.sflag [#allocation4], 1
    %929 = vsyncpa %s928, 1

</llo_original>
